<compile_context>
chip_gen: v6e
topology: v6e:2x2x1
jax: 0.10.0
libtpu: 0.0.40
codegen_flags: <defaults>
</compile_context>

<pallas_src>
import functools

import jax
import jax.numpy as jnp
from jax.experimental import pallas as pl
from jax.experimental.pallas import tpu as pltpu


def _round_up(v, m):
    return ((v + m - 1) // m) * m


def _num_tensorcores():
    """v7x has 2 TensorCores per chip; v5e/v6e have 1 (conservative fallback)."""
    try:
        kind = (getattr(jax.devices()[0], "device_kind", "") or "").lower()
        if "v7" in kind:
            return 2
    except Exception:
        pass
    return 1


_NUM_TC = _num_tensorcores()

# Cap on the lane tile.  At TN=4096 the live intermediates are
# (8+64+128+64+8)*TN*4B ~ 4.5 MiB -> trivially under the scoped-VMEM default
# on v5e/v6e/v7x, while a step carries enough work to hide per-step overhead.
_TN_MAX = 4096


def mlp_kernel(x_ref, w1_ref, b1_ref, w2_ref, b2_ref,
               w3_ref, b3_ref, w4_ref, b4_ref, o_ref, *, mxu_dtype):
    """Feature-major MLP; every operand is (features, TN) with N on lanes.

    Weights arrive pre-cast to `mxu_dtype` (bf16 for single-pass MXU, f32 for
    the exact-reference mode).  Activations are cast right before each dot;
    accumulation, bias adds and ReLUs stay in f32.
    """
    x = x_ref[...].astype(mxu_dtype)                       # (8, TN); rows 3..7 zero

    # Layer 1: (64, 8) @ (8, TN) on the MXU (zero-padded K).
    h = jnp.dot(w1_ref[...], x, preferred_element_type=jnp.float32) + b1_ref[...]
    h = jnp.maximum(h, 0.0)                                # (64, TN) f32

    # Layer 2: (128, 64) @ (64, TN)
    h = jnp.dot(w2_ref[...], h.astype(mxu_dtype),
                preferred_element_type=jnp.float32) + b2_ref[...]
    h = jnp.maximum(h, 0.0)                                # (128, TN)

    # Layer 3: (64, 128) @ (128, TN)
    h = jnp.dot(w3_ref[...], h.astype(mxu_dtype),
                preferred_element_type=jnp.float32) + b3_ref[...]
    h = jnp.maximum(h, 0.0)                                # (64, TN)

    # Layer 4: (8, 64) @ (64, TN) -- M padded 3 -> 8 so the store is unmasked.
    out = jnp.dot(w4_ref[...], h.astype(mxu_dtype),
                  preferred_element_type=jnp.float32) + b4_ref[...]
    o_ref[...] = out.astype(o_ref.dtype)                   # (8, TN) lane-dense store


@functools.partial(jax.jit, static_argnames=("num_cores", "use_bf16"))
def _lorenz_mlp_forward_impl(x, params, *, num_cores, use_bf16):
    N, F = x.shape
    assert F == 3

    # --- Tiling: few, large, balanced tiles --------------------------------
    # Step count is a multiple of num_cores (v7x: both TCs get equal tiles,
    # v5e/v6e: no forced extra step).  TN is derived from N so the last tile
    # is nearly full, capped at _TN_MAX.
    steps_per_core = max(1, pl.cdiv(N, num_cores * _TN_MAX))
    grid_n = num_cores * steps_per_core
    tn = max(128, _round_up(pl.cdiv(N, grid_n), 128))
    n_pad = grid_n * tn

    mxu_dtype = jnp.bfloat16 if use_bf16 else jnp.float32

    # Feature-major input, zero-padded to (8, n_pad): rows 3..7 and columns
    # N.. are zero so they contribute nothing through the layer-1 matmul.
    # TODO(synk): if callers can hand data feature-major, skip this transpose.
    xt = jnp.zeros((8, n_pad), x.dtype).at[:3, :N].set(x.T)

    # Torch-native params: weight (out, in), bias (out, 1).  Pad tiny dims.
    w1 = jnp.zeros((64, 8), mxu_dtype).at[:, :3].set(params["w1"].astype(mxu_dtype))
    b1 = params["b1"]
    w2 = params["w2"].astype(mxu_dtype)
    b2 = params["b2"]
    w3 = params["w3"].astype(mxu_dtype)
    b3 = params["b3"]
    w4 = jnp.zeros((8, 64), mxu_dtype).at[:3, :].set(params["w4"].astype(mxu_dtype))
    b4 = jnp.zeros((8, 1), jnp.float32).at[:3, :].set(params["b4"])

    def full_spec(arr):
        # Whole array, same (VMEM-resident) block every grid step.
        return pl.BlockSpec(arr.shape, lambda i: (0,) * arr.ndim)

    out_t = pl.pallas_call(
        functools.partial(mlp_kernel, mxu_dtype=mxu_dtype),
        out_shape=jax.ShapeDtypeStruct((8, n_pad), x.dtype),
        grid_spec=pltpu.PrefetchScalarGridSpec(
            num_scalar_prefetch=0,
            grid=(grid_n,),
            in_specs=[
                pl.BlockSpec((8, tn), lambda i: (0, i)),   # x column tile
                full_spec(w1), full_spec(b1),
                full_spec(w2), full_spec(b2),
                full_spec(w3), full_spec(b3),
                full_spec(w4), full_spec(b4),
            ],
            out_specs=pl.BlockSpec((8, tn), lambda i: (0, i)),
        ),
        compiler_params=pltpu.CompilerParams(
            dimension_semantics=("parallel",),
        ),
    )(xt, w1, b1, w2, b2, w3, b3, w4, b4)

    return out_t[:3, :N].T


def lorenz_mlp_forward(x, params, *, use_bf16=True):
    """Torch-compatible forward: x (N, 3) float32 -> (N, 3) float32."""
    return _lorenz_mlp_forward_impl(x, params, num_cores=_NUM_TC, use_bf16=use_bf16)


def init_params(key):
    """torch.nn.Linear default init: U(-1/sqrt(in), 1/sqrt(in)) for W and b.
    Stored torch-native: weight (out, in), bias (out, 1)."""
    dims = [(3, 64), (64, 128), (128, 64), (64, 3)]
    params = {}
    for idx, (fin, fout) in enumerate(dims, start=1):
        key, kw, kb = jax.random.split(key, 3)
        bound = 1.0 / jnp.sqrt(jnp.float32(fin))
        params[f"w{idx}"] = jax.random.uniform(
            kw, (fout, fin), jnp.float32, minval=-bound, maxval=bound)
        params[f"b{idx}"] = jax.random.uniform(
            kb, (fout, 1), jnp.float32, minval=-bound, maxval=bound)
    return params


def reference_forward(x, p):
    h = jnp.maximum(x @ p["w1"].T + p["b1"].T, 0.0)
    h = jnp.maximum(h @ p["w2"].T + p["b2"].T, 0.0)
    h = jnp.maximum(h @ p["w3"].T + p["b3"].T, 0.0)
    return h @ p["w4"].T + p["b4"].T


if __name__ == "__main__":
    key = jax.random.PRNGKey(0)
    key, kx = jax.random.split(key)

    N = 64  # batch of Lorenz states (x, y, z)
    x = jax.random.normal(kx, (N, 3), jnp.float32) * 10.0

    params = init_params(key)
    ref = reference_forward(x, params)

    # Exact-reference mode (f32 MXU operands): tight agreement.
    out_f32 = jax.block_until_ready(lorenz_mlp_forward(x, params, use_bf16=False))
    assert out_f32.shape == (N, 3)
    assert jnp.allclose(out_f32, ref, atol=2e-3, rtol=2e-3)

    # Fast path (bf16 MXU operands, f32 accumulation): loose relative check.
    out = jax.block_until_ready(lorenz_mlp_forward(x, params))
    assert out.shape == (N, 3)
    rel_err = jnp.max(jnp.abs(out - ref)) / (jnp.max(jnp.abs(ref)) + 1e-6)
    assert rel_err < 2e-2, float(rel_err)

    print("KERNEL_OK")
</pallas_src>

<mosaic_0001>
module attributes {stable_mosaic.version = 11 : i64} {
  func.func @mlp_kernel(%arg0: i32, %arg1: memref<8x128xf32, #tpu.memory_space<vmem>>, %arg2: memref<64x8xf32, #tpu.memory_space<vmem>>, %arg3: memref<64x1xf32, #tpu.memory_space<vmem>>, %arg4: memref<128x64xf32, #tpu.memory_space<vmem>>, %arg5: memref<128x1xf32, #tpu.memory_space<vmem>>, %arg6: memref<64x128xf32, #tpu.memory_space<vmem>>, %arg7: memref<64x1xf32, #tpu.memory_space<vmem>>, %arg8: memref<8x64xf32, #tpu.memory_space<vmem>>, %arg9: memref<8x1xf32, #tpu.memory_space<vmem>>, %arg10: memref<8x128xf32, #tpu.memory_space<vmem>>) attributes {dimension_semantics = [#tpu.dimension_semantics<parallel>], iteration_bounds = array<i64: 1>, scalar_prefetch = 0 : i64, scratch_operands = 0 : i64, tpu.core_type = #tpu.core_type<tc>, window_params = [{transform_indices = @transform_0, window_bounds = array<i64: 8, 128>}, {pipeline_mode = #tpu.pipeline_mode<synchronous>, transform_indices = @transform_1, window_bounds = array<i64: 64, 8>}, {pipeline_mode = #tpu.pipeline_mode<synchronous>, transform_indices = @transform_2, window_bounds = array<i64: 64, 1>}, {pipeline_mode = #tpu.pipeline_mode<synchronous>, transform_indices = @transform_3, window_bounds = array<i64: 128, 64>}, {pipeline_mode = #tpu.pipeline_mode<synchronous>, transform_indices = @transform_4, window_bounds = array<i64: 128, 1>}, {pipeline_mode = #tpu.pipeline_mode<synchronous>, transform_indices = @transform_5, window_bounds = array<i64: 64, 128>}, {pipeline_mode = #tpu.pipeline_mode<synchronous>, transform_indices = @transform_6, window_bounds = array<i64: 64, 1>}, {pipeline_mode = #tpu.pipeline_mode<synchronous>, transform_indices = @transform_7, window_bounds = array<i64: 8, 64>}, {pipeline_mode = #tpu.pipeline_mode<synchronous>, transform_indices = @transform_8, window_bounds = array<i64: 8, 1>}, {transform_indices = @transform_9, window_bounds = array<i64: 8, 128>}]} {
    %c0 = arith.constant 0 : index
    %c0_0 = arith.constant 0 : index
    %0 = vector.load %arg1[%c0, %c0_0] : memref<8x128xf32, #tpu.memory_space<vmem>>, vector<8x128xf32>
    %c0_1 = arith.constant 0 : index
    %c0_2 = arith.constant 0 : index
    %1 = vector.load %arg2[%c0_1, %c0_2] : memref<64x8xf32, #tpu.memory_space<vmem>>, vector<64x8xf32>
    %cst = arith.constant dense<0.000000e+00> : vector<64x128xf32>
    %2 = tpu.matmul %1, %0, %cst {dimension_numbers = #tpu.dot_dimension_numbers<[1], [0], [0], [1], [0, 0, 1, 1], [], []>} : vector<64x8xf32>, vector<8x128xf32>, vector<64x128xf32> -> vector<64x128xf32>
    %c0_3 = arith.constant 0 : index
    %c0_4 = arith.constant 0 : index
    %3 = vector.load %arg3[%c0_3, %c0_4] : memref<64x1xf32, #tpu.memory_space<vmem>>, vector<64x1xf32>
    %4 = vector.broadcast %3 : vector<64x1xf32> to vector<64x128xf32>
    %5 = arith.addf %2, %4 : vector<64x128xf32>
    %cst_5 = arith.constant 0.000000e+00 : f32
    %6 = vector.broadcast %cst_5 : f32 to vector<64x128xf32>
    %7 = arith.maximumf %5, %6 : vector<64x128xf32>
    %c0_6 = arith.constant 0 : index
    %c0_7 = arith.constant 0 : index
    %8 = vector.load %arg4[%c0_6, %c0_7] : memref<128x64xf32, #tpu.memory_space<vmem>>, vector<128x64xf32>
    %cst_8 = arith.constant dense<0.000000e+00> : vector<128x128xf32>
    %9 = tpu.matmul %8, %7, %cst_8 {dimension_numbers = #tpu.dot_dimension_numbers<[1], [0], [0], [1], [0, 0, 1, 1], [], []>} : vector<128x64xf32>, vector<64x128xf32>, vector<128x128xf32> -> vector<128x128xf32>
    %c0_9 = arith.constant 0 : index
    %c0_10 = arith.constant 0 : index
    %10 = vector.load %arg5[%c0_9, %c0_10] : memref<128x1xf32, #tpu.memory_space<vmem>>, vector<128x1xf32>
    %11 = vector.broadcast %10 : vector<128x1xf32> to vector<128x128xf32>
    %12 = arith.addf %9, %11 : vector<128x128xf32>
    %cst_11 = arith.constant 0.000000e+00 : f32
    %13 = vector.broadcast %cst_11 : f32 to vector<128x128xf32>
    %14 = arith.maximumf %12, %13 : vector<128x128xf32>
    %c0_12 = arith.constant 0 : index
    %c0_13 = arith.constant 0 : index
    %15 = vector.load %arg6[%c0_12, %c0_13] : memref<64x128xf32, #tpu.memory_space<vmem>>, vector<64x128xf32>
    %cst_14 = arith.constant dense<0.000000e+00> : vector<64x128xf32>
    %16 = tpu.matmul %15, %14, %cst_14 {dimension_numbers = #tpu.dot_dimension_numbers<[1], [0], [0], [1], [0, 0, 1, 1], [], []>} : vector<64x128xf32>, vector<128x128xf32>, vector<64x128xf32> -> vector<64x128xf32>
    %c0_15 = arith.constant 0 : index
    %c0_16 = arith.constant 0 : index
    %17 = vector.load %arg7[%c0_15, %c0_16] : memref<64x1xf32, #tpu.memory_space<vmem>>, vector<64x1xf32>
    %18 = vector.broadcast %17 : vector<64x1xf32> to vector<64x128xf32>
    %19 = arith.addf %16, %18 : vector<64x128xf32>
    %cst_17 = arith.constant 0.000000e+00 : f32
    %20 = vector.broadcast %cst_17 : f32 to vector<64x128xf32>
    %21 = arith.maximumf %19, %20 : vector<64x128xf32>
    %c0_18 = arith.constant 0 : index
    %c0_19 = arith.constant 0 : index
    %22 = vector.load %arg8[%c0_18, %c0_19] : memref<8x64xf32, #tpu.memory_space<vmem>>, vector<8x64xf32>
    %cst_20 = arith.constant dense<0.000000e+00> : vector<8x128xf32>
    %23 = tpu.matmul %22, %21, %cst_20 {dimension_numbers = #tpu.dot_dimension_numbers<[1], [0], [0], [1], [0, 0, 1, 1], [], []>} : vector<8x64xf32>, vector<64x128xf32>, vector<8x128xf32> -> vector<8x128xf32>
    %c0_21 = arith.constant 0 : index
    %c0_22 = arith.constant 0 : index
    %24 = vector.load %arg9[%c0_21, %c0_22] : memref<8x1xf32, #tpu.memory_space<vmem>>, vector<8x1xf32>
    %25 = vector.broadcast %24 : vector<8x1xf32> to vector<8x128xf32>
    %26 = arith.addf %23, %25 : vector<8x128xf32>
    %c0_23 = arith.constant 0 : index
    %c0_24 = arith.constant 0 : index
    %27 = vector.load %arg10[%c0_23, %c0_24] : memref<8x128xf32, #tpu.memory_space<vmem>>, vector<8x128xf32>
    tpu.vector_store %arg10[%c0_23, %c0_24], %26 {strides = array<i32>} : memref<8x128xf32, #tpu.memory_space<vmem>>, vector<8x128xf32>,
    return
  }
  func.func @transform_0(%arg0: i32) -> (i32, i32) {
    %c0_i32 = arith.constant 0 : i32
    %c0_i32_0 = arith.constant 0 : i32
    return %c0_i32, %arg0 : i32, i32
  }
  func.func @transform_1(%arg0: i32) -> (i32, i32) {
    %c0_i32 = arith.constant 0 : i32
    %c0_i32_0 = arith.constant 0 : i32
    %c0_i32_1 = arith.constant 0 : i32
    return %c0_i32, %c0_i32_0 : i32, i32
  }
  func.func @transform_2(%arg0: i32) -> (i32, i32) {
    %c0_i32 = arith.constant 0 : i32
    %c0_i32_0 = arith.constant 0 : i32
    %c0_i32_1 = arith.constant 0 : i32
    return %c0_i32, %c0_i32_0 : i32, i32
  }
  func.func @transform_3(%arg0: i32) -> (i32, i32) {
    %c0_i32 = arith.constant 0 : i32
    %c0_i32_0 = arith.constant 0 : i32
    %c0_i32_1 = arith.constant 0 : i32
    return %c0_i32, %c0_i32_0 : i32, i32
  }
  func.func @transform_4(%arg0: i32) -> (i32, i32) {
    %c0_i32 = arith.constant 0 : i32
    %c0_i32_0 = arith.constant 0 : i32
    %c0_i32_1 = arith.constant 0 : i32
    return %c0_i32, %c0_i32_0 : i32, i32
  }
  func.func @transform_5(%arg0: i32) -> (i32, i32) {
    %c0_i32 = arith.constant 0 : i32
    %c0_i32_0 = arith.constant 0 : i32
    %c0_i32_1 = arith.constant 0 : i32
    return %c0_i32, %c0_i32_0 : i32, i32
  }
  func.func @transform_6(%arg0: i32) -> (i32, i32) {
    %c0_i32 = arith.constant 0 : i32
    %c0_i32_0 = arith.constant 0 : i32
    %c0_i32_1 = arith.constant 0 : i32
    return %c0_i32, %c0_i32_0 : i32, i32
  }
  func.func @transform_7(%arg0: i32) -> (i32, i32) {
    %c0_i32 = arith.constant 0 : i32
    %c0_i32_0 = arith.constant 0 : i32
    %c0_i32_1 = arith.constant 0 : i32
    return %c0_i32, %c0_i32_0 : i32, i32
  }
  func.func @transform_8(%arg0: i32) -> (i32, i32) {
    %c0_i32 = arith.constant 0 : i32
    %c0_i32_0 = arith.constant 0 : i32
    %c0_i32_1 = arith.constant 0 : i32
    return %c0_i32, %c0_i32_0 : i32, i32
  }
  func.func @transform_9(%arg0: i32) -> (i32, i32) {
    %c0_i32 = arith.constant 0 : i32
    %c0_i32_0 = arith.constant 0 : i32
    return %c0_i32, %arg0 : i32, i32
  }
}

</mosaic_0001>

<llo_original>
// kernel: _lorenz_mlp_forward_impl.1
$region0: #{_lorenz_mlp_forward_impl.1}
  #allocation0 [shape = 'u32[]', space=smem, size = 0x4, offset = 0x4, fixed_abs, tag = 'smem constant byte address 0x4 - core index']
  #allocation1 [shape = 'u32[144,128]{1,0:T(1,128)}', space=vmem, size = 0x12000, scoped, tag = 'internal scratch']
  %s0 = inlined_call_operand.vmem [shape: f32[8,128], index: 0, kind: input, shape index: {}]
  %s1 = inlined_call_operand.vmem [shape: f32[64,8], index: 1, kind: input, shape index: {}]
  %s2 = inlined_call_operand.vmem [shape: f32[64,1], index: 2, kind: input, shape index: {}]
  %s3 = inlined_call_operand.vmem [shape: f32[128,64], index: 3, kind: input, shape index: {}]
  %s4 = inlined_call_operand.vmem [shape: f32[128,1], index: 4, kind: input, shape index: {}]
  %s5 = inlined_call_operand.vmem [shape: f32[64,128], index: 5, kind: input, shape index: {}]
  %s6 = inlined_call_operand.vmem [shape: f32[64,1], index: 6, kind: input, shape index: {}]
  %s7 = inlined_call_operand.vmem [shape: f32[8,64], index: 7, kind: input, shape index: {}]
  %s8 = inlined_call_operand.vmem [shape: f32[8,1], index: 8, kind: input, shape index: {}]
  %s9 = inlined_call_operand.vmem [shape: f32[8,128], index: 9, kind: output, shape index: {}]
  %s10 = sld [smem:[#allocation0]]
  $region46: #{_lorenz_mlp_forward_impl.1} parent=0
    _
  %s12 = ssub.s32 1, %s10
  %s13 = scalar_select 0, %s12, %s10
  // Predicated region
  $region2: #{_lorenz_mlp_forward_impl.1} parent=0 // pred_check
    _
  $region3: #{_lorenz_mlp_forward_impl.1} parent=0 // pred_check_branch
    %15 = sbr.rel (0) target = $region5
  $region4: #{_lorenz_mlp_forward_impl.1} parent=0 // pred_region
    _
  $region5: #{_lorenz_mlp_forward_impl.1} parent=0 // pred_fallthru
    _
  // Predicated region
  $region6: #{_lorenz_mlp_forward_impl.1} parent=0 // pred_check
    _
  $region7: #{_lorenz_mlp_forward_impl.1} parent=0 // pred_check_branch
    %17 = sbr.rel (0) target = $region9
  $region8: #{_lorenz_mlp_forward_impl.1} parent=0 // pred_region
    _
  $region9: #{_lorenz_mlp_forward_impl.1} parent=0 // pred_fallthru
    _
  // Predicated region
  $region10: #{_lorenz_mlp_forward_impl.1} parent=0 // pred_check
    _
  $region11: #{_lorenz_mlp_forward_impl.1} parent=0 // pred_check_branch
    %19 = sbr.rel (0) target = $region13
  $region12: #{_lorenz_mlp_forward_impl.1} parent=0 // pred_region
    _
  $region13: #{_lorenz_mlp_forward_impl.1} parent=0 // pred_fallthru
    _
  // Predicated region
  $region14: #{_lorenz_mlp_forward_impl.1} parent=0 // pred_check
    _
  $region15: #{_lorenz_mlp_forward_impl.1} parent=0 // pred_check_branch
    %21 = sbr.rel (0) target = $region17
  $region16: #{_lorenz_mlp_forward_impl.1} parent=0 // pred_region
    _
  $region17: #{_lorenz_mlp_forward_impl.1} parent=0 // pred_fallthru
    _
  // Predicated region
  $region18: #{_lorenz_mlp_forward_impl.1} parent=0 // pred_check
    _
  $region19: #{_lorenz_mlp_forward_impl.1} parent=0 // pred_check_branch
    %23 = sbr.rel (0) target = $region21
  $region20: #{_lorenz_mlp_forward_impl.1} parent=0 // pred_region
    _
  $region21: #{_lorenz_mlp_forward_impl.1} parent=0 // pred_fallthru
    _
  // Predicated region
  $region22: #{_lorenz_mlp_forward_impl.1} parent=0 // pred_check
    _
  $region23: #{_lorenz_mlp_forward_impl.1} parent=0 // pred_check_branch
    %25 = sbr.rel (0) target = $region25
  $region24: #{_lorenz_mlp_forward_impl.1} parent=0 // pred_region
    _
  $region25: #{_lorenz_mlp_forward_impl.1} parent=0 // pred_fallthru
    _
  // Predicated region
  $region26: #{_lorenz_mlp_forward_impl.1} parent=0 // pred_check
    _
  $region27: #{_lorenz_mlp_forward_impl.1} parent=0 // pred_check_branch
    %27 = sbr.rel (0) target = $region29
  $region28: #{_lorenz_mlp_forward_impl.1} parent=0 // pred_region
    _
  $region29: #{_lorenz_mlp_forward_impl.1} parent=0 // pred_fallthru
    _
  // Predicated region
  $region30: #{_lorenz_mlp_forward_impl.1} parent=0 // pred_check
    _
  $region31: #{_lorenz_mlp_forward_impl.1} parent=0 // pred_check_branch
    %29 = sbr.rel (0) target = $region33
  $region32: #{_lorenz_mlp_forward_impl.1} parent=0 // pred_region
    _
  $region33: #{_lorenz_mlp_forward_impl.1} parent=0 // pred_fallthru
    _
  // Predicated region
  $region34: #{_lorenz_mlp_forward_impl.1} parent=0 // pred_check
    _
  $region35: #{_lorenz_mlp_forward_impl.1} parent=0 // pred_check_branch
    %31 = sbr.rel (0) target = $region37
  $region36: #{_lorenz_mlp_forward_impl.1} parent=0 // pred_region
    _
  $region37: #{_lorenz_mlp_forward_impl.1} parent=0 // pred_fallthru
    _
  %v32 = vld [vmem:[%s0] sm:$0xff]
  %v33 = vld [vmem:[%s1] sm:$0xff]
  %v34 = vld [vmem:[%s1 + $0x8] sm:$0xff]
  %v35 = vld [vmem:[%s1 + $0x10] sm:$0xff]
  %v36 = vld [vmem:[%s1 + $0x18] sm:$0xff]
  %v37 = vld [vmem:[%s1 + $0x20] sm:$0xff]
  %v38 = vld [vmem:[%s1 + $0x28] sm:$0xff]
  %v39 = vld [vmem:[%s1 + $0x30] sm:$0xff]
  %v40 = vld [vmem:[%s1 + $0x38] sm:$0xff]
  %v41 = vld [vmem:[%s2] sm:$0xff]
  %v42 = vld [vmem:[%s2 + $0x8] sm:$0xff]
  %v43 = vld [vmem:[%s2 + $0x10] sm:$0xff]
  %v44 = vld [vmem:[%s2 + $0x18] sm:$0xff]
  %v45 = vld [vmem:[%s2 + $0x20] sm:$0xff]
  %v46 = vld [vmem:[%s2 + $0x28] sm:$0xff]
  %v47 = vld [vmem:[%s2 + $0x30] sm:$0xff]
  %v48 = vld [vmem:[%s2 + $0x38] sm:$0xff]
  %50 = vset.pattern.permute.xlu0 0
  %51 = vperm.xlu0 %50, %v41
  %v52 = vpop.permute.xlu0 %51
  %55 = vset.pattern.permute.xlu0 0
  %56 = vperm.xlu0 %55, %v42
  %v57 = vpop.permute.xlu0 %56
  %60 = vset.pattern.permute.xlu0 0
  %61 = vperm.xlu0 %60, %v43
  %v62 = vpop.permute.xlu0 %61
  %65 = vset.pattern.permute.xlu0 0
  %66 = vperm.xlu0 %65, %v44
  %v67 = vpop.permute.xlu0 %66
  %70 = vset.pattern.permute.xlu0 0
  %71 = vperm.xlu0 %70, %v45
  %v72 = vpop.permute.xlu0 %71
  %75 = vset.pattern.permute.xlu0 0
  %76 = vperm.xlu0 %75, %v46
  %v77 = vpop.permute.xlu0 %76
  %80 = vset.pattern.permute.xlu0 0
  %81 = vperm.xlu0 %80, %v47
  %v82 = vpop.permute.xlu0 %81
  %85 = vset.pattern.permute.xlu0 0
  %86 = vperm.xlu0 %85, %v48
  %v87 = vpop.permute.xlu0 %86
  %vm89 = vcmask 64512
  %v91 = vsel %vm89, %v33, 0
  %v94 = vsel %vm89, %v34, 0
  %v97 = vsel %vm89, %v35, 0
  %v100 = vsel %vm89, %v36, 0
  %v103 = vsel %vm89, %v37, 0
  %v106 = vsel %vm89, %v38, 0
  %v109 = vsel %vm89, %v39, 0
  %v112 = vsel %vm89, %v40, 0
  %114 = vmatprep.subr.mxu0 0.0
  %115 = vmatpush1.msra.mxu0 0.0
  %116 = vmatprep.subr.mxu0 0.0
  %117 = vmatpush1.msra.mxu0 0.0
  %118 = vmatprep.subr.mxu0 0.0
  %119 = vmatpush1.msra.mxu0 0.0
  %120 = vmatprep.subr.mxu0 0.0
  %121 = vmatpush1.msra.mxu0 0.0
  %122 = vmatprep.subr.mxu0 0.0
  %123 = vmatpush1.msra.mxu0 0.0
  %124 = vmatprep.subr.mxu0 0.0
  %125 = vmatpush1.msra.mxu0 0.0
  %126 = vmatprep.subr.mxu0 0.0
  %127 = vmatpush1.msra.mxu0 0.0
  %128 = vmatprep.subr.mxu0 0.0
  %129 = vmatpush1.msra.mxu0 0.0
  %130 = vmatprep.subr.mxu0 0.0
  %131 = vmatpush1.msra.mxu0 0.0
  %132 = vmatprep.subr.mxu0 0.0
  %133 = vmatpush1.msra.mxu0 0.0
  %134 = vmatprep.subr.mxu0 0.0
  %135 = vmatpush1.msra.mxu0 0.0
  %136 = vmatprep.subr.mxu0 0.0
  %137 = vmatpush1.msra.mxu0 0.0
  %138 = vmatprep.subr.mxu0 0.0
  %139 = vmatpush1.msra.mxu0 0.0
  %140 = vmatprep.subr.mxu0 0.0
  %141 = vmatpush1.msra.mxu0 0.0
  %142 = vmatprep.subr.mxu0 0.0
  %143 = vmatpush1.msra.mxu0 0.0
  %144 = vmatprep.subr.mxu0 0.0
  %145 = vmatpush1.msra.mxu0 %v32
  %146 = vmatprep.subr.mxu0 0.0
  %147 = vmatpush2.msra.mxu0 0.0
  %148 = vmatprep.subr.mxu0 0.0
  %149 = vmatpush2.msra.mxu0 0.0
  %150 = vmatprep.subr.mxu0 0.0
  %151 = vmatpush2.msra.mxu0 0.0
  %152 = vmatprep.subr.mxu0 0.0
  %153 = vmatpush2.msra.mxu0 0.0
  %154 = vmatprep.subr.mxu0 0.0
  %155 = vmatpush2.msra.mxu0 0.0
  %156 = vmatprep.subr.mxu0 0.0
  %157 = vmatpush2.msra.mxu0 0.0
  %158 = vmatprep.subr.mxu0 0.0
  %159 = vmatpush2.msra.mxu0 0.0
  %160 = vmatprep.subr.mxu0 0.0
  %161 = vmatpush2.msra.mxu0 0.0
  %162 = vmatprep.subr.mxu0 0.0
  %163 = vmatpush2.msra.mxu0 0.0
  %164 = vmatprep.subr.mxu0 0.0
  %165 = vmatpush2.msra.mxu0 0.0
  %166 = vmatprep.subr.mxu0 0.0
  %167 = vmatpush2.msra.mxu0 0.0
  %168 = vmatprep.subr.mxu0 0.0
  %169 = vmatpush2.msra.mxu0 0.0
  %170 = vmatprep.subr.mxu0 0.0
  %171 = vmatpush2.msra.mxu0 0.0
  %172 = vmatprep.subr.mxu0 0.0
  %173 = vmatpush2.msra.mxu0 0.0
  %174 = vmatprep.subr.mxu0 0.0
  %175 = vmatpush2.msra.mxu0 0.0
  %176 = vmatprep.subr.mxu0 0.0
  %177 = vmatpush2.msra.mxu0 0.0
  %178 = vmatprep.mubr.f32.mxu0 0.0
  %179 = vmatmul.mubr.f32.gmra.mxu0 %v91
  %v180 = vpop.f32.mrf.mxu0
  %v181 = vadd.f32 %v52, %v180
  %v182 = vpop.f32.mrf.mxu0
  %183 = vmatprep.mubr.f32.mxu0 0.0
  %184 = vmatmul.mubr.f32.gmra.mxu0 %v94
  %v185 = vpop.f32.mrf.mxu0
  %v186 = vadd.f32 %v57, %v185
  %v187 = vpop.f32.mrf.mxu0
  %188 = vmatprep.mubr.f32.mxu0 0.0
  %189 = vmatmul.mubr.f32.gmra.mxu0 %v97
  %v190 = vpop.f32.mrf.mxu0
  %v191 = vadd.f32 %v62, %v190
  %v192 = vpop.f32.mrf.mxu0
  %193 = vmatprep.mubr.f32.mxu0 0.0
  %194 = vmatmul.mubr.f32.gmra.mxu0 %v100
  %v195 = vpop.f32.mrf.mxu0
  %v196 = vadd.f32 %v67, %v195
  %v197 = vpop.f32.mrf.mxu0
  %198 = vmatprep.mubr.f32.mxu0 0.0
  %199 = vmatmul.mubr.f32.gmra.mxu0 %v103
  %v200 = vpop.f32.mrf.mxu0
  %v201 = vadd.f32 %v72, %v200
  %v202 = vpop.f32.mrf.mxu0
  %203 = vmatprep.mubr.f32.mxu0 0.0
  %204 = vmatmul.mubr.f32.gmra.mxu0 %v106
  %v205 = vpop.f32.mrf.mxu0
  %v206 = vadd.f32 %v77, %v205
  %v207 = vpop.f32.mrf.mxu0
  %208 = vmatprep.mubr.f32.mxu0 0.0
  %209 = vmatmul.mubr.f32.gmra.mxu0 %v109
  %v210 = vpop.f32.mrf.mxu0
  %v211 = vadd.f32 %v82, %v210
  %v212 = vpop.f32.mrf.mxu0
  %213 = vmatprep.mubr.f32.mxu0 0.0
  %214 = vmatmul.mubr.f32.gmra.mxu0 %v112
  %v215 = vpop.f32.mrf.mxu0
  %v216 = vadd.f32 %v87, %v215
  %v217 = vpop.f32.mrf.mxu0
  %218 = vdwg.mxu0
  %v219 = vmax.f32 %v181, 0.0
  %v220 = vmax.f32 %v186, 0.0
  %v221 = vmax.f32 %v191, 0.0
  %v222 = vmax.f32 %v196, 0.0
  %v223 = vmax.f32 %v201, 0.0
  %v224 = vmax.f32 %v206, 0.0
  %v225 = vmax.f32 %v211, 0.0
  %v226 = vmax.f32 %v216, 0.0
  %v227 = vld [vmem:[%s3] sm:$0xff]
  %v228 = vld [vmem:[%s3 + $0x8] sm:$0xff]
  %v229 = vld [vmem:[%s3 + $0x10] sm:$0xff]
  %v230 = vld [vmem:[%s3 + $0x18] sm:$0xff]
  %v231 = vld [vmem:[%s3 + $0x20] sm:$0xff]
  %v232 = vld [vmem:[%s3 + $0x28] sm:$0xff]
  %v233 = vld [vmem:[%s3 + $0x30] sm:$0xff]
  %v234 = vld [vmem:[%s3 + $0x38] sm:$0xff]
  %v235 = vld [vmem:[%s3 + $0x40] sm:$0xff]
  %v236 = vld [vmem:[%s3 + $0x48] sm:$0xff]
  %v237 = vld [vmem:[%s3 + $0x50] sm:$0xff]
  %v238 = vld [vmem:[%s3 + $0x58] sm:$0xff]
  %v239 = vld [vmem:[%s3 + $0x60] sm:$0xff]
  %v240 = vld [vmem:[%s3 + $0x68] sm:$0xff]
  %v241 = vld [vmem:[%s3 + $0x70] sm:$0xff]
  %v242 = vld [vmem:[%s3 + $0x78] sm:$0xff]
  %v243 = vld [vmem:[%s4] sm:$0xff]
  %v244 = vld [vmem:[%s4 + $0x8] sm:$0xff]
  %v245 = vld [vmem:[%s4 + $0x10] sm:$0xff]
  %v246 = vld [vmem:[%s4 + $0x18] sm:$0xff]
  %v247 = vld [vmem:[%s4 + $0x20] sm:$0xff]
  %v248 = vld [vmem:[%s4 + $0x28] sm:$0xff]
  %v249 = vld [vmem:[%s4 + $0x30] sm:$0xff]
  %v250 = vld [vmem:[%s4 + $0x38] sm:$0xff]
  %v251 = vld [vmem:[%s4 + $0x40] sm:$0xff]
  %v252 = vld [vmem:[%s4 + $0x48] sm:$0xff]
  %v253 = vld [vmem:[%s4 + $0x50] sm:$0xff]
  %v254 = vld [vmem:[%s4 + $0x58] sm:$0xff]
  %v255 = vld [vmem:[%s4 + $0x60] sm:$0xff]
  %v256 = vld [vmem:[%s4 + $0x68] sm:$0xff]
  %v257 = vld [vmem:[%s4 + $0x70] sm:$0xff]
  %v258 = vld [vmem:[%s4 + $0x78] sm:$0xff]
  %260 = vset.pattern.permute.xlu0 0
  %261 = vperm.xlu0 %260, %v243
  %v262 = vpop.permute.xlu0 %261
  %265 = vset.pattern.permute.xlu0 0
  %266 = vperm.xlu0 %265, %v244
  %v267 = vpop.permute.xlu0 %266
  %270 = vset.pattern.permute.xlu0 0
  %271 = vperm.xlu0 %270, %v245
  %v272 = vpop.permute.xlu0 %271
  %275 = vset.pattern.permute.xlu0 0
  %276 = vperm.xlu0 %275, %v246
  %v277 = vpop.permute.xlu0 %276
  %280 = vset.pattern.permute.xlu0 0
  %281 = vperm.xlu0 %280, %v247
  %v282 = vpop.permute.xlu0 %281
  %285 = vset.pattern.permute.xlu0 0
  %286 = vperm.xlu0 %285, %v248
  %v287 = vpop.permute.xlu0 %286
  %290 = vset.pattern.permute.xlu0 0
  %291 = vperm.xlu0 %290, %v249
  %v292 = vpop.permute.xlu0 %291
  %295 = vset.pattern.permute.xlu0 0
  %296 = vperm.xlu0 %295, %v250
  %v297 = vpop.permute.xlu0 %296
  %300 = vset.pattern.permute.xlu0 0
  %301 = vperm.xlu0 %300, %v251
  %v302 = vpop.permute.xlu0 %301
  %305 = vset.pattern.permute.xlu0 0
  %306 = vperm.xlu0 %305, %v252
  %v307 = vpop.permute.xlu0 %306
  %310 = vset.pattern.permute.xlu0 0
  %311 = vperm.xlu0 %310, %v253
  %v312 = vpop.permute.xlu0 %311
  %315 = vset.pattern.permute.xlu0 0
  %316 = vperm.xlu0 %315, %v254
  %v317 = vpop.permute.xlu0 %316
  %320 = vset.pattern.permute.xlu0 0
  %321 = vperm.xlu0 %320, %v255
  %v322 = vpop.permute.xlu0 %321
  %325 = vset.pattern.permute.xlu0 0
  %326 = vperm.xlu0 %325, %v256
  %v327 = vpop.permute.xlu0 %326
  %330 = vset.pattern.permute.xlu0 0
  %331 = vperm.xlu0 %330, %v257
  %v332 = vpop.permute.xlu0 %331
  %335 = vset.pattern.permute.xlu0 0
  %336 = vperm.xlu0 %335, %v258
  %v337 = vpop.permute.xlu0 %336
  %vm339 = vcmask 523264
  %v341 = vsel %vm339, %v227, 0
  %v344 = vsel %vm339, %v228, 0
  %v347 = vsel %vm339, %v229, 0
  %v350 = vsel %vm339, %v230, 0
  %v353 = vsel %vm339, %v231, 0
  %v356 = vsel %vm339, %v232, 0
  %v359 = vsel %vm339, %v233, 0
  %v362 = vsel %vm339, %v234, 0
  %v365 = vsel %vm339, %v235, 0
  %v368 = vsel %vm339, %v236, 0
  %v371 = vsel %vm339, %v237, 0
  %v374 = vsel %vm339, %v238, 0
  %v377 = vsel %vm339, %v239, 0
  %v380 = vsel %vm339, %v240, 0
  %v383 = vsel %vm339, %v241, 0
  %v386 = vsel %vm339, %v242, 0
  %388 = vmatprep.subr.mxu0 0.0
  %389 = vmatpush1.msra.mxu0 0.0
  %390 = vmatprep.subr.mxu0 0.0
  %391 = vmatpush1.msra.mxu0 0.0
  %392 = vmatprep.subr.mxu0 0.0
  %393 = vmatpush1.msra.mxu0 0.0
  %394 = vmatprep.subr.mxu0 0.0
  %395 = vmatpush1.msra.mxu0 0.0
  %396 = vmatprep.subr.mxu0 0.0
  %397 = vmatpush1.msra.mxu0 0.0
  %398 = vmatprep.subr.mxu0 0.0
  %399 = vmatpush1.msra.mxu0 0.0
  %400 = vmatprep.subr.mxu0 0.0
  %401 = vmatpush1.msra.mxu0 0.0
  %402 = vmatprep.subr.mxu0 0.0
  %403 = vmatpush1.msra.mxu0 0.0
  %404 = vmatprep.subr.mxu0 0.0
  %405 = vmatpush1.msra.mxu0 %v226
  %406 = vmatprep.subr.mxu0 0.0
  %407 = vmatpush1.msra.mxu0 %v225
  %408 = vmatprep.subr.mxu0 0.0
  %409 = vmatpush1.msra.mxu0 %v224
  %410 = vmatprep.subr.mxu0 0.0
  %411 = vmatpush1.msra.mxu0 %v223
  %412 = vmatprep.subr.mxu0 0.0
  %413 = vmatpush1.msra.mxu0 %v222
  %414 = vmatprep.subr.mxu0 0.0
  %415 = vmatpush1.msra.mxu0 %v221
  %416 = vmatprep.subr.mxu0 0.0
  %417 = vmatpush1.msra.mxu0 %v220
  %418 = vmatprep.subr.mxu0 0.0
  %419 = vmatpush1.msra.mxu0 %v219
  %420 = vmatprep.subr.mxu0 0.0
  %421 = vmatpush2.msra.mxu0 0.0
  %422 = vmatprep.subr.mxu0 0.0
  %423 = vmatpush2.msra.mxu0 0.0
  %424 = vmatprep.subr.mxu0 0.0
  %425 = vmatpush2.msra.mxu0 0.0
  %426 = vmatprep.subr.mxu0 0.0
  %427 = vmatpush2.msra.mxu0 0.0
  %428 = vmatprep.subr.mxu0 0.0
  %429 = vmatpush2.msra.mxu0 0.0
  %430 = vmatprep.subr.mxu0 0.0
  %431 = vmatpush2.msra.mxu0 0.0
  %432 = vmatprep.subr.mxu0 0.0
  %433 = vmatpush2.msra.mxu0 0.0
  %434 = vmatprep.subr.mxu0 0.0
  %435 = vmatpush2.msra.mxu0 0.0
  %436 = vmatprep.subr.mxu0 0.0
  %437 = vmatpush2.msra.mxu0 0.0
  %438 = vmatprep.subr.mxu0 0.0
  %439 = vmatpush2.msra.mxu0 0.0
  %440 = vmatprep.subr.mxu0 0.0
  %441 = vmatpush2.msra.mxu0 0.0
  %442 = vmatprep.subr.mxu0 0.0
  %443 = vmatpush2.msra.mxu0 0.0
  %444 = vmatprep.subr.mxu0 0.0
  %445 = vmatpush2.msra.mxu0 0.0
  %446 = vmatprep.subr.mxu0 0.0
  %447 = vmatpush2.msra.mxu0 0.0
  %448 = vmatprep.subr.mxu0 0.0
  %449 = vmatpush2.msra.mxu0 0.0
  %450 = vmatprep.subr.mxu0 0.0
  %451 = vmatpush2.msra.mxu0 0.0
  %452 = vmatprep.mubr.f32.mxu0 0.0
  %453 = vmatmul.mubr.f32.gmra.mxu0 %v341
  %v454 = vpop.f32.mrf.mxu0
  %v455 = vadd.f32 %v262, %v454
  %v456 = vpop.f32.mrf.mxu0
  %457 = vmatprep.mubr.f32.mxu0 0.0
  %458 = vmatmul.mubr.f32.gmra.mxu0 %v344
  %v459 = vpop.f32.mrf.mxu0
  %v460 = vadd.f32 %v267, %v459
  %v461 = vpop.f32.mrf.mxu0
  %462 = vmatprep.mubr.f32.mxu0 0.0
  %463 = vmatmul.mubr.f32.gmra.mxu0 %v347
  %v464 = vpop.f32.mrf.mxu0
  %v465 = vadd.f32 %v272, %v464
  %v466 = vpop.f32.mrf.mxu0
  %467 = vmatprep.mubr.f32.mxu0 0.0
  %468 = vmatmul.mubr.f32.gmra.mxu0 %v350
  %v469 = vpop.f32.mrf.mxu0
  %v470 = vadd.f32 %v277, %v469
  %v471 = vpop.f32.mrf.mxu0
  %472 = vmatprep.mubr.f32.mxu0 0.0
  %473 = vmatmul.mubr.f32.gmra.mxu0 %v353
  %v474 = vpop.f32.mrf.mxu0
  %v475 = vadd.f32 %v282, %v474
  %v476 = vpop.f32.mrf.mxu0
  %477 = vmatprep.mubr.f32.mxu0 0.0
  %478 = vmatmul.mubr.f32.gmra.mxu0 %v356
  %v479 = vpop.f32.mrf.mxu0
  %v480 = vadd.f32 %v287, %v479
  %v481 = vpop.f32.mrf.mxu0
  %482 = vmatprep.mubr.f32.mxu0 0.0
  %483 = vmatmul.mubr.f32.gmra.mxu0 %v359
  %v484 = vpop.f32.mrf.mxu0
  %v485 = vadd.f32 %v292, %v484
  %v486 = vpop.f32.mrf.mxu0
  %487 = vmatprep.mubr.f32.mxu0 0.0
  %488 = vmatmul.mubr.f32.gmra.mxu0 %v362
  %v489 = vpop.f32.mrf.mxu0
  %v490 = vadd.f32 %v297, %v489
  %v491 = vpop.f32.mrf.mxu0
  %492 = vmatprep.mubr.f32.mxu0 0.0
  %493 = vmatmul.mubr.f32.gmra.mxu0 %v365
  %v494 = vpop.f32.mrf.mxu0
  %v495 = vadd.f32 %v302, %v494
  %v496 = vpop.f32.mrf.mxu0
  %497 = vmatprep.mubr.f32.mxu0 0.0
  %498 = vmatmul.mubr.f32.gmra.mxu0 %v368
  %v499 = vpop.f32.mrf.mxu0
  %v500 = vadd.f32 %v307, %v499
  %v501 = vpop.f32.mrf.mxu0
  %502 = vmatprep.mubr.f32.mxu0 0.0
  %503 = vmatmul.mubr.f32.gmra.mxu0 %v371
  %v504 = vpop.f32.mrf.mxu0
  %v505 = vadd.f32 %v312, %v504
  %v506 = vpop.f32.mrf.mxu0
  %507 = vmatprep.mubr.f32.mxu0 0.0
  %508 = vmatmul.mubr.f32.gmra.mxu0 %v374
  %v509 = vpop.f32.mrf.mxu0
  %v510 = vadd.f32 %v317, %v509
  %v511 = vpop.f32.mrf.mxu0
  %512 = vmatprep.mubr.f32.mxu0 0.0
  %513 = vmatmul.mubr.f32.gmra.mxu0 %v377
  %v514 = vpop.f32.mrf.mxu0
  %v515 = vadd.f32 %v322, %v514
  %v516 = vpop.f32.mrf.mxu0
  %517 = vmatprep.mubr.f32.mxu0 0.0
  %518 = vmatmul.mubr.f32.gmra.mxu0 %v380
  %v519 = vpop.f32.mrf.mxu0
  %v520 = vadd.f32 %v327, %v519
  %v521 = vpop.f32.mrf.mxu0
  %522 = vmatprep.mubr.f32.mxu0 0.0
  %523 = vmatmul.mubr.f32.gmra.mxu0 %v383
  %v524 = vpop.f32.mrf.mxu0
  %v525 = vadd.f32 %v332, %v524
  %v526 = vpop.f32.mrf.mxu0
  %527 = vmatprep.mubr.f32.mxu0 0.0
  %528 = vmatmul.mubr.f32.gmra.mxu0 %v386
  %v529 = vpop.f32.mrf.mxu0
  %v530 = vadd.f32 %v337, %v529
  %v531 = vpop.f32.mrf.mxu0
  %532 = vdwg.mxu0
  %v533 = vmax.f32 %v455, 0.0
  %v534 = vmax.f32 %v460, 0.0
  %v535 = vmax.f32 %v465, 0.0
  %v536 = vmax.f32 %v470, 0.0
  %v537 = vmax.f32 %v475, 0.0
  %v538 = vmax.f32 %v480, 0.0
  %v539 = vmax.f32 %v485, 0.0
  %v540 = vmax.f32 %v490, 0.0
  %v541 = vmax.f32 %v495, 0.0
  %v542 = vmax.f32 %v500, 0.0
  %v543 = vmax.f32 %v505, 0.0
  %v544 = vmax.f32 %v510, 0.0
  %v545 = vmax.f32 %v515, 0.0
  %v546 = vmax.f32 %v520, 0.0
  %v547 = vmax.f32 %v525, 0.0
  %v548 = vmax.f32 %v530, 0.0
  %v549 = vld [vmem:[%s5] sm:$0xff]
  %v550 = vld [vmem:[%s5 + $0x8] sm:$0xff]
  %v551 = vld [vmem:[%s5 + $0x10] sm:$0xff]
  %v552 = vld [vmem:[%s5 + $0x18] sm:$0xff]
  %v553 = vld [vmem:[%s5 + $0x20] sm:$0xff]
  %v554 = vld [vmem:[%s5 + $0x28] sm:$0xff]
  %v555 = vld [vmem:[%s5 + $0x30] sm:$0xff]
  %v556 = vld [vmem:[%s5 + $0x38] sm:$0xff]
  %v557 = vld [vmem:[%s6] sm:$0xff]
  %v558 = vld [vmem:[%s6 + $0x8] sm:$0xff]
  %v559 = vld [vmem:[%s6 + $0x10] sm:$0xff]
  %v560 = vld [vmem:[%s6 + $0x18] sm:$0xff]
  %v561 = vld [vmem:[%s6 + $0x20] sm:$0xff]
  %v562 = vld [vmem:[%s6 + $0x28] sm:$0xff]
  %v563 = vld [vmem:[%s6 + $0x30] sm:$0xff]
  %v564 = vld [vmem:[%s6 + $0x38] sm:$0xff]
  %566 = vset.pattern.permute.xlu0 0
  %567 = vperm.xlu0 %566, %v557
  %v568 = vpop.permute.xlu0 %567
  %571 = vset.pattern.permute.xlu0 0
  %572 = vperm.xlu0 %571, %v558
  %v573 = vpop.permute.xlu0 %572
  %576 = vset.pattern.permute.xlu0 0
  %577 = vperm.xlu0 %576, %v559
  %v578 = vpop.permute.xlu0 %577
  %581 = vset.pattern.permute.xlu0 0
  %582 = vperm.xlu0 %581, %v560
  %v583 = vpop.permute.xlu0 %582
  %586 = vset.pattern.permute.xlu0 0
  %587 = vperm.xlu0 %586, %v561
  %v588 = vpop.permute.xlu0 %587
  %591 = vset.pattern.permute.xlu0 0
  %592 = vperm.xlu0 %591, %v562
  %v593 = vpop.permute.xlu0 %592
  %596 = vset.pattern.permute.xlu0 0
  %597 = vperm.xlu0 %596, %v563
  %v598 = vpop.permute.xlu0 %597
  %601 = vset.pattern.permute.xlu0 0
  %602 = vperm.xlu0 %601, %v564
  %v603 = vpop.permute.xlu0 %602
  %605 = vmatprep.subr.mxu0 0.0
  %606 = vmatpush1.msra.mxu0 %v548
  %607 = vmatprep.subr.mxu0 0.0
  %608 = vmatpush1.msra.mxu0 %v547
  %609 = vmatprep.subr.mxu0 0.0
  %610 = vmatpush1.msra.mxu0 %v546
  %611 = vmatprep.subr.mxu0 0.0
  %612 = vmatpush1.msra.mxu0 %v545
  %613 = vmatprep.subr.mxu0 0.0
  %614 = vmatpush1.msra.mxu0 %v544
  %615 = vmatprep.subr.mxu0 0.0
  %616 = vmatpush1.msra.mxu0 %v543
  %617 = vmatprep.subr.mxu0 0.0
  %618 = vmatpush1.msra.mxu0 %v542
  %619 = vmatprep.subr.mxu0 0.0
  %620 = vmatpush1.msra.mxu0 %v541
  %621 = vmatprep.subr.mxu0 0.0
  %622 = vmatpush1.msra.mxu0 %v540
  %623 = vmatprep.subr.mxu0 0.0
  %624 = vmatpush1.msra.mxu0 %v539
  %625 = vmatprep.subr.mxu0 0.0
  %626 = vmatpush1.msra.mxu0 %v538
  %627 = vmatprep.subr.mxu0 0.0
  %628 = vmatpush1.msra.mxu0 %v537
  %629 = vmatprep.subr.mxu0 0.0
  %630 = vmatpush1.msra.mxu0 %v536
  %631 = vmatprep.subr.mxu0 0.0
  %632 = vmatpush1.msra.mxu0 %v535
  %633 = vmatprep.subr.mxu0 0.0
  %634 = vmatpush1.msra.mxu0 %v534
  %635 = vmatprep.subr.mxu0 0.0
  %636 = vmatpush1.msra.mxu0 %v533
  %637 = vmatprep.subr.mxu0 0.0
  %638 = vmatpush2.msra.mxu0 0.0
  %639 = vmatprep.subr.mxu0 0.0
  %640 = vmatpush2.msra.mxu0 0.0
  %641 = vmatprep.subr.mxu0 0.0
  %642 = vmatpush2.msra.mxu0 0.0
  %643 = vmatprep.subr.mxu0 0.0
  %644 = vmatpush2.msra.mxu0 0.0
  %645 = vmatprep.subr.mxu0 0.0
  %646 = vmatpush2.msra.mxu0 0.0
  %647 = vmatprep.subr.mxu0 0.0
  %648 = vmatpush2.msra.mxu0 0.0
  %649 = vmatprep.subr.mxu0 0.0
  %650 = vmatpush2.msra.mxu0 0.0
  %651 = vmatprep.subr.mxu0 0.0
  %652 = vmatpush2.msra.mxu0 0.0
  %653 = vmatprep.subr.mxu0 0.0
  %654 = vmatpush2.msra.mxu0 0.0
  %655 = vmatprep.subr.mxu0 0.0
  %656 = vmatpush2.msra.mxu0 0.0
  %657 = vmatprep.subr.mxu0 0.0
  %658 = vmatpush2.msra.mxu0 0.0
  %659 = vmatprep.subr.mxu0 0.0
  %660 = vmatpush2.msra.mxu0 0.0
  %661 = vmatprep.subr.mxu0 0.0
  %662 = vmatpush2.msra.mxu0 0.0
  %663 = vmatprep.subr.mxu0 0.0
  %664 = vmatpush2.msra.mxu0 0.0
  %665 = vmatprep.subr.mxu0 0.0
  %666 = vmatpush2.msra.mxu0 0.0
  %667 = vmatprep.subr.mxu0 0.0
  %668 = vmatpush2.msra.mxu0 0.0
  %669 = vmatprep.mubr.f32.mxu0 0.0
  %670 = vmatmul.mubr.f32.gmra.mxu0 %v549
  %v671 = vpop.f32.mrf.mxu0
  %v672 = vadd.f32 %v568, %v671
  %v673 = vpop.f32.mrf.mxu0
  %674 = vmatprep.mubr.f32.mxu0 0.0
  %675 = vmatmul.mubr.f32.gmra.mxu0 %v550
  %v676 = vpop.f32.mrf.mxu0
  %v677 = vadd.f32 %v573, %v676
  %v678 = vpop.f32.mrf.mxu0
  %679 = vmatprep.mubr.f32.mxu0 0.0
  %680 = vmatmul.mubr.f32.gmra.mxu0 %v551
  %v681 = vpop.f32.mrf.mxu0
  %v682 = vadd.f32 %v578, %v681
  %v683 = vpop.f32.mrf.mxu0
  %684 = vmatprep.mubr.f32.mxu0 0.0
  %685 = vmatmul.mubr.f32.gmra.mxu0 %v552
  %v686 = vpop.f32.mrf.mxu0
  %v687 = vadd.f32 %v583, %v686
  %v688 = vpop.f32.mrf.mxu0
  %689 = vmatprep.mubr.f32.mxu0 0.0
  %690 = vmatmul.mubr.f32.gmra.mxu0 %v553
  %v691 = vpop.f32.mrf.mxu0
  %v692 = vadd.f32 %v588, %v691
  %v693 = vpop.f32.mrf.mxu0
  %694 = vmatprep.mubr.f32.mxu0 0.0
  %695 = vmatmul.mubr.f32.gmra.mxu0 %v554
  %v696 = vpop.f32.mrf.mxu0
  %v697 = vadd.f32 %v593, %v696
  %v698 = vpop.f32.mrf.mxu0
  %699 = vmatprep.mubr.f32.mxu0 0.0
  %700 = vmatmul.mubr.f32.gmra.mxu0 %v555
  %v701 = vpop.f32.mrf.mxu0
  %v702 = vadd.f32 %v598, %v701
  %v703 = vpop.f32.mrf.mxu0
  %704 = vmatprep.mubr.f32.mxu0 0.0
  %705 = vmatmul.mubr.f32.gmra.mxu0 %v556
  %v706 = vpop.f32.mrf.mxu0
  %v707 = vadd.f32 %v603, %v706
  %v708 = vpop.f32.mrf.mxu0
  %709 = vdwg.mxu0
  %v710 = vmax.f32 %v672, 0.0
  %v711 = vmax.f32 %v677, 0.0
  %v712 = vmax.f32 %v682, 0.0
  %v713 = vmax.f32 %v687, 0.0
  %v714 = vmax.f32 %v692, 0.0
  %v715 = vmax.f32 %v697, 0.0
  %v716 = vmax.f32 %v702, 0.0
  %v717 = vmax.f32 %v707, 0.0
  %v718 = vld [vmem:[%s7] sm:$0xff]
  %v719 = vld [vmem:[%s8] sm:$0xff]
  %721 = vset.pattern.permute.xlu0 0
  %722 = vperm.xlu0 %721, %v719
  %v723 = vpop.permute.xlu0 %722
  %v726 = vsel %vm339, %v718, 0
  %728 = vmatprep.subr.mxu0 0.0
  %729 = vmatpush1.msra.mxu0 0.0
  %730 = vmatprep.subr.mxu0 0.0
  %731 = vmatpush1.msra.mxu0 0.0
  %732 = vmatprep.subr.mxu0 0.0
  %733 = vmatpush1.msra.mxu0 0.0
  %734 = vmatprep.subr.mxu0 0.0
  %735 = vmatpush1.msra.mxu0 0.0
  %736 = vmatprep.subr.mxu0 0.0
  %737 = vmatpush1.msra.mxu0 0.0
  %738 = vmatprep.subr.mxu0 0.0
  %739 = vmatpush1.msra.mxu0 0.0
  %740 = vmatprep.subr.mxu0 0.0
  %741 = vmatpush1.msra.mxu0 0.0
  %742 = vmatprep.subr.mxu0 0.0
  %743 = vmatpush1.msra.mxu0 0.0
  %744 = vmatprep.subr.mxu0 0.0
  %745 = vmatpush1.msra.mxu0 %v717
  %746 = vmatprep.subr.mxu0 0.0
  %747 = vmatpush1.msra.mxu0 %v716
  %748 = vmatprep.subr.mxu0 0.0
  %749 = vmatpush1.msra.mxu0 %v715
  %750 = vmatprep.subr.mxu0 0.0
  %751 = vmatpush1.msra.mxu0 %v714
  %752 = vmatprep.subr.mxu0 0.0
  %753 = vmatpush1.msra.mxu0 %v713
  %754 = vmatprep.subr.mxu0 0.0
  %755 = vmatpush1.msra.mxu0 %v712
  %756 = vmatprep.subr.mxu0 0.0
  %757 = vmatpush1.msra.mxu0 %v711
  %758 = vmatprep.subr.mxu0 0.0
  %759 = vmatpush1.msra.mxu0 %v710
  %760 = vmatprep.subr.mxu0 0.0
  %761 = vmatpush2.msra.mxu0 0.0
  %762 = vmatprep.subr.mxu0 0.0
  %763 = vmatpush2.msra.mxu0 0.0
  %764 = vmatprep.subr.mxu0 0.0
  %765 = vmatpush2.msra.mxu0 0.0
  %766 = vmatprep.subr.mxu0 0.0
  %767 = vmatpush2.msra.mxu0 0.0
  %768 = vmatprep.subr.mxu0 0.0
  %769 = vmatpush2.msra.mxu0 0.0
  %770 = vmatprep.subr.mxu0 0.0
  %771 = vmatpush2.msra.mxu0 0.0
  %772 = vmatprep.subr.mxu0 0.0
  %773 = vmatpush2.msra.mxu0 0.0
  %774 = vmatprep.subr.mxu0 0.0
  %775 = vmatpush2.msra.mxu0 0.0
  %776 = vmatprep.subr.mxu0 0.0
  %777 = vmatpush2.msra.mxu0 0.0
  %778 = vmatprep.subr.mxu0 0.0
  %779 = vmatpush2.msra.mxu0 0.0
  %780 = vmatprep.subr.mxu0 0.0
  %781 = vmatpush2.msra.mxu0 0.0
  %782 = vmatprep.subr.mxu0 0.0
  %783 = vmatpush2.msra.mxu0 0.0
  %784 = vmatprep.subr.mxu0 0.0
  %785 = vmatpush2.msra.mxu0 0.0
  %786 = vmatprep.subr.mxu0 0.0
  %787 = vmatpush2.msra.mxu0 0.0
  %788 = vmatprep.subr.mxu0 0.0
  %789 = vmatpush2.msra.mxu0 0.0
  %790 = vmatprep.subr.mxu0 0.0
  %791 = vmatpush2.msra.mxu0 0.0
  %792 = vmatprep.mubr.f32.mxu0 0.0
  %793 = vmatmul.mubr.f32.gmra.mxu0 %v726
  %v794 = vpop.f32.mrf.mxu0
  %v795 = vadd.f32 %v723, %v794
  %v796 = vpop.f32.mrf.mxu0
  %797 = vdwg.mxu0
  %798 = vst [vmem:[%s9] sm:$0xff] %v795
  // Predicated region
  $region38: #{_lorenz_mlp_forward_impl.1} parent=0 // pred_check
    _
  $region39: #{_lorenz_mlp_forward_impl.1} parent=0 // pred_check_branch
    %800 = sbr.rel (0) target = $region41
  $region40: #{_lorenz_mlp_forward_impl.1} parent=0 // pred_region
    _
  $region41: #{_lorenz_mlp_forward_impl.1} parent=0 // pred_fallthru
    _
  // Predicated region
  $region42: #{_lorenz_mlp_forward_impl.1} parent=0 // pred_check
    _
  $region43: #{_lorenz_mlp_forward_impl.1} parent=0 // pred_check_branch
    %802 = sbr.rel (0) target = $region45
  $region44: #{_lorenz_mlp_forward_impl.1} parent=0 // pred_region
    _
  $region45: #{_lorenz_mlp_forward_impl.1} parent=0 // pred_fallthru
    _

</llo_original>
